<compile_context>
chip_gen: v7x
topology: tpu7x:2x2x1
jax: 0.10.0
libtpu: 0.0.40
codegen_flags: <defaults>
</compile_context>

<pallas_src>
import functools

import jax
import jax.numpy as jnp
from jax import lax
from jax.experimental import pallas as pl
from jax.experimental.pallas import tpu as pltpu

_SUBLANE = 8  # f32 sublane count


def _apply_activation(y, activation):
    if activation == "logistic":
        return jax.nn.sigmoid(y)
    if activation == "leaky":
        # Original module uses nn.LeakyReLU(0.1) (Darknet convention).
        return jnp.where(y >= 0.0, y, 0.1 * y)
    if activation in ("relu", "relu+"):
        return jnp.maximum(y, 0.0)
    if activation == "relu6":
        return jnp.clip(y, 0.0, 6.0)
    if activation == "tanh":
        return jnp.tanh(y)
    return y  # "linear": no activation layer


def _fc_kernel(x_ref, w_ref, b_ref, o_ref, acc_ref, *, activation):
    # Grid axes: (N tile j [parallel], K tile k [arbitrary / reduction]).
    #   x_ref  : (1, tk)   slice of the flattened input vector
    #   w_ref  : (tk, tn)  pre-transposed weight tile (K-major -> MXU-ready)
    #   b_ref  : (1, tn)   bias tile (f32)
    #   o_ref  : (1, tn)   output tile, written once on the last K step
    #   acc_ref: (8, tn)   f32 accumulator scratch, resident across the K axis
    k = pl.program_id(1)

    @pl.when(k == 0)
    def _():
        acc_ref[...] = jnp.zeros_like(acc_ref)

    # Replicate the single input row to a full sublane tile inside the kernel
    # (no 8x-replicated array materialized in HBM).
    x = jnp.broadcast_to(x_ref[...], (_SUBLANE, x_ref.shape[1]))
    acc_ref[...] += jnp.dot(x, w_ref[...], preferred_element_type=jnp.float32)

    @pl.when(k == pl.num_programs(1) - 1)
    def _():
        y = acc_ref[0:1, :] + b_ref[...]          # row 0 holds the result
        y = _apply_activation(y, activation)
        o_ref[...] = y.astype(o_ref.dtype)        # single unmasked store


def _round_up(x, m):
    return ((x + m - 1) // m) * m


def _choose_tile(dim, preferred, min_steps=1):
    """Pick a 128-multiple tile <= preferred and the zero-padded extent it divides."""
    tile = min(preferred, _round_up(dim, 128))
    padded = _round_up(dim, tile)
    # Prefer >=2 steps on the parallel (output) axis so both v7x TensorCores
    # get work; harmless on single-TC chips.
    while min_steps > 1 and padded // tile < min_steps and tile > 128:
        tile -= 128
        padded = _round_up(dim, tile)
    return tile, padded


def fc_pallas(x, weight, bias, activation, *, tile_n=512, tile_k=512):
    """Pallas equivalent of FC.forward. weight: (output, input), bias: (output,)."""
    n_out, n_in = weight.shape
    compute_dtype = weight.dtype  # keep the weight's native dtype (no forced upcast)

    v = x.reshape(-1).astype(compute_dtype)
    assert v.shape[0] == n_in, (v.shape, n_in)

    tn, n_pad = _choose_tile(n_out, tile_n, min_steps=2)
    tk, k_pad = _choose_tile(n_in, tile_k)

    # One-time layout prep (const-folded under jit for static inference weights):
    # transpose to (K, N) and zero-pad to the tiled extents.
    wt = weight.T
    if (k_pad, n_pad) != (n_in, n_out):
        wt = jnp.pad(wt, ((0, k_pad - n_in), (0, n_pad - n_out)))
    if k_pad != n_in:
        v = jnp.pad(v, (0, k_pad - n_in))
    b = bias.astype(jnp.float32)
    if n_pad != n_out:
        b = jnp.pad(b, (0, n_pad - n_out))

    x1 = v.reshape(1, k_pad)
    b1 = b.reshape(1, n_pad)

    grid = (n_pad // tn, k_pad // tk)

    out = pl.pallas_call(
        functools.partial(_fc_kernel, activation=activation),
        out_shape=jax.ShapeDtypeStruct((1, n_pad), jnp.float32),
        grid=grid,
        in_specs=[
            pl.BlockSpec((1, tk), lambda j, k: (0, k)),    # input slice
            pl.BlockSpec((tk, tn), lambda j, k: (k, j)),   # weight tile (K, N)
            pl.BlockSpec((1, tn), lambda j, k: (0, j)),    # bias tile
        ],
        out_specs=pl.BlockSpec((1, tn), lambda j, k: (0, j)),
        scratch_shapes=[pltpu.VMEM((_SUBLANE, tn), jnp.float32)],
        compiler_params=pltpu.CompilerParams(
            dimension_semantics=("parallel", "arbitrary"),
            vmem_limit_bytes=32 * 1024 * 1024,
        ),
    )(x1, wt, b1)

    return out[0, :n_out]


def fc_reference(x, weight, bias, activation):
    """Pure-JAX re-implementation of FC.forward, for verification."""
    v = x.reshape(-1).astype(jnp.float32)
    y = jnp.dot(v, weight.astype(jnp.float32).T, precision=lax.Precision.HIGHEST)
    y = y + bias.astype(jnp.float32)
    return _apply_activation(y, activation)


def _run_case(key, shape_x, n_in, n_out, activation):
    kx, kw, kb = jax.random.split(key, 3)
    x = jax.random.normal(kx, shape_x, dtype=jnp.float32)
    bound = 1.0 / (n_in ** 0.5)  # nn.Linear default init range
    weight = jax.random.uniform(kw, (n_out, n_in), jnp.float32, -bound, bound)
    bias = jax.random.uniform(kb, (n_out,), jnp.float32, -bound, bound)

    out = jax.block_until_ready(fc_pallas(x, weight, bias, activation))
    ref = fc_reference(x, weight, bias, activation)

    assert out.shape == (n_out,), out.shape
    max_err = float(jnp.max(jnp.abs(out - ref)))
    assert jnp.allclose(out, ref, atol=1e-3, rtol=1e-3), (activation, max_err)


if __name__ == "__main__":
    key = jax.random.PRNGKey(0)
    k0, k1, k2 = jax.random.split(key, 3)

    # FC(input=512, output=256, activation='leaky'); forward flattens x to (512,)
    _run_case(k0, (2, 4, 8, 8), 512, 256, "leaky")
    # Non-128-multiple shapes exercise the zero-padding path.
    _run_case(k1, (300,), 300, 200, "tanh")
    # Multiple K-reduction steps exercise the accumulator init/finalize path.
    _run_case(k2, (3, 400), 1200, 384, "logistic")

    print("KERNEL_OK")
</pallas_src>

<mosaic_0001>
module attributes {stable_mosaic.version = 11 : i64} {
  func.func @_fc_kernel(%arg0: i32, %arg1: i32, %arg2: memref<1x512xf32, #tpu.memory_space<vmem>>, %arg3: memref<512x128xf32, #tpu.memory_space<vmem>>, %arg4: memref<1x128xf32, #tpu.memory_space<vmem>>, %arg5: memref<1x128xf32, #tpu.memory_space<vmem>>, %arg6: memref<8x128xf32, #tpu.memory_space<vmem>>) attributes {dimension_semantics = [#tpu.dimension_semantics<parallel>, #tpu.dimension_semantics<arbitrary>], iteration_bounds = array<i64: 2, 1>, scalar_prefetch = 0 : i64, scratch_operands = 1 : i64, tpu.core_type = #tpu.core_type<tc>, window_params = [{transform_indices = @transform_0, window_bounds = array<i64: 1, 512>}, {transform_indices = @transform_1, window_bounds = array<i64: 512, 128>}, {transform_indices = @transform_2, window_bounds = array<i64: 1, 128>}, {transform_indices = @transform_3, window_bounds = array<i64: 1, 128>}]} {
    %c0_i32 = arith.constant 0 : i32
    %0 = arith.cmpi eq, %arg1, %c0_i32 : i32
    %1 = arith.extui %0 : i1 to i32
    %c0_i32_0 = arith.constant 0 : i32
    %2 = arith.cmpi ne, %1, %c0_i32_0 : i32
    scf.if %2 {
      %cst_10 = arith.constant 0.000000e+00 : f32
      %14 = vector.broadcast %cst_10 : f32 to vector<8x128xf32>
      %c0_11 = arith.constant 0 : index
      %c0_12 = arith.constant 0 : index
      %15 = vector.load %arg6[%c0_11, %c0_12] : memref<8x128xf32, #tpu.memory_space<vmem>>, vector<8x128xf32>
      tpu.vector_store %arg6[%c0_11, %c0_12], %14 {strides = array<i32>} : memref<8x128xf32, #tpu.memory_space<vmem>>, vector<8x128xf32>,
    } else {
    }
    %c0 = arith.constant 0 : index
    %c0_1 = arith.constant 0 : index
    %3 = vector.load %arg2[%c0, %c0_1] : memref<1x512xf32, #tpu.memory_space<vmem>>, vector<1x512xf32>
    %4 = vector.shape_cast %3 : vector<1x512xf32> to vector<1x512xf32>
    %5 = vector.broadcast %4 : vector<1x512xf32> to vector<8x512xf32>
    %c0_2 = arith.constant 0 : index
    %c0_3 = arith.constant 0 : index
    %6 = vector.load %arg6[%c0_2, %c0_3] : memref<8x128xf32, #tpu.memory_space<vmem>>, vector<8x128xf32>
    %c0_4 = arith.constant 0 : index
    %c0_5 = arith.constant 0 : index
    %7 = vector.load %arg3[%c0_4, %c0_5] : memref<512x128xf32, #tpu.memory_space<vmem>>, vector<512x128xf32>
    %cst = arith.constant dense<0.000000e+00> : vector<8x128xf32>
    %8 = tpu.matmul %5, %7, %cst {dimension_numbers = #tpu.dot_dimension_numbers<[1], [0], [0], [1], [0, 0, 1, 1], [], []>} : vector<8x512xf32>, vector<512x128xf32>, vector<8x128xf32> -> vector<8x128xf32>
    %9 = arith.addf %6, %8 : vector<8x128xf32>
    %c0_6 = arith.constant 0 : index
    %c0_7 = arith.constant 0 : index
    %10 = vector.load %arg6[%c0_6, %c0_7] : memref<8x128xf32, #tpu.memory_space<vmem>>, vector<8x128xf32>
    tpu.vector_store %arg6[%c0_6, %c0_7], %9 {strides = array<i32>} : memref<8x128xf32, #tpu.memory_space<vmem>>, vector<8x128xf32>,
    %c0_i32_8 = arith.constant 0 : i32
    %11 = arith.cmpi eq, %arg1, %c0_i32_8 : i32
    %12 = arith.extui %11 : i1 to i32
    %c0_i32_9 = arith.constant 0 : i32
    %13 = arith.cmpi ne, %12, %c0_i32_9 : i32
    scf.if %13 {
      %c0_10 = arith.constant 0 : index
      %c0_11 = arith.constant 0 : index
      %14 = vector.load %arg6[%c0_10, %c0_11] : memref<8x128xf32, #tpu.memory_space<vmem>>, vector<1x128xf32>
      %c0_12 = arith.constant 0 : index
      %c0_13 = arith.constant 0 : index
      %15 = vector.load %arg4[%c0_12, %c0_13] : memref<1x128xf32, #tpu.memory_space<vmem>>, vector<1x128xf32>
      %16 = arith.addf %14, %15 : vector<1x128xf32>
      %cst_14 = arith.constant 0.000000e+00 : f32
      %17 = vector.broadcast %cst_14 : f32 to vector<1x128xf32>
      %18 = arith.cmpf oge, %16, %17 : vector<1x128xf32>
      %cst_15 = arith.constant 1.000000e-01 : f32
      %19 = vector.broadcast %cst_15 : f32 to vector<1x128xf32>
      %20 = arith.mulf %19, %16 : vector<1x128xf32>
      %21 = arith.select %18, %16, %20 : vector<1x128xi1>, vector<1x128xf32>
      %c0_16 = arith.constant 0 : index
      %c0_17 = arith.constant 0 : index
      %22 = vector.load %arg5[%c0_16, %c0_17] : memref<1x128xf32, #tpu.memory_space<vmem>>, vector<1x128xf32>
      tpu.vector_store %arg5[%c0_16, %c0_17], %21 {strides = array<i32>} : memref<1x128xf32, #tpu.memory_space<vmem>>, vector<1x128xf32>,
    } else {
    }
    return
  }
  func.func @transform_0(%arg0: i32, %arg1: i32) -> (i32, i32) {
    %c0_i32 = arith.constant 0 : i32
    %c0_i32_0 = arith.constant 0 : i32
    return %c0_i32, %arg1 : i32, i32
  }
  func.func @transform_1(%arg0: i32, %arg1: i32) -> (i32, i32) {
    %c0_i32 = arith.constant 0 : i32
    return %arg1, %arg0 : i32, i32
  }
  func.func @transform_2(%arg0: i32, %arg1: i32) -> (i32, i32) {
    %c0_i32 = arith.constant 0 : i32
    %c0_i32_0 = arith.constant 0 : i32
    return %c0_i32, %arg0 : i32, i32
  }
  func.func @transform_3(%arg0: i32, %arg1: i32) -> (i32, i32) {
    %c0_i32 = arith.constant 0 : i32
    %c0_i32_0 = arith.constant 0 : i32
    return %c0_i32, %arg0 : i32, i32
  }
}

</mosaic_0001>

<llo_original>
// kernel: tpu_custom_call.1
$region0: #{tpu_custom_call.1}
  #allocation0 [shape = 'u32[]', space=smem, size = 0x4, offset = 0x4, fixed_abs, tag = 'smem constant byte address 0x4 - core index']
  #allocation1 [shape = 'u32[144,128]{1,0:T(1,128)}', space=vmem, size = 0x12000, scoped, tag = 'internal scratch']
  #allocation2 [shape = 'f32[8,128]{1,0:T(8,128)}', space=vmem, size = 0x1000, scoped, tag = 'scratch operand']
  %s0 = inlined_call_operand.hbm [shape: f32[1,512], index: 0, kind: input, shape index: {}]
  %s1 = inlined_call_operand.hbm [shape: f32[512,256], index: 1, kind: input, shape index: {}]
  %s2 = inlined_call_operand.vmem [shape: f32[1,256], index: 2, kind: input, shape index: {}]
  %s3 = inlined_call_operand.hbm [shape: f32[1,256], index: 3, kind: output, shape index: {}]
  %s4 = sld [smem:[#allocation0]]
  $region61: #{tpu_custom_call.1} parent=0
    _
  %s6 = ssub.s32 1, %s4
  %s7 = scalar_select 0, %s6, %s4
  $region1: #{tpu_custom_call.1} parent=0
    #allocation3 [shape = 'u8[2048]{0}', space=vmem, size = 0x800, scoped, tag = 'input window, operand 0, single buffered']
    #allocation4 [shape = 's32[2]{0}', space=sflag, size = 0x8, scoped, tag = 'scoped memory for tpu_custom_call.1']
    #allocation5 [shape = 's32[2]{0}', space=sflag, size = 0x8, scoped, tag = 'scoped memory for tpu_custom_call.1']
    #allocation6 [shape = 'u8[524288]{0}', space=vmem, size = 0x80000, scoped, tag = 'input window, operand 1']
    #allocation7 [shape = 's32[2]{0}', space=sflag, size = 0x8, scoped, tag = 'scoped memory for tpu_custom_call.1']
    #allocation8 [shape = 'u8[1024]{0}', space=vmem, size = 0x400, scoped, tag = 'output window, operand 0']
    %8 = vsyncpa [#allocation4], 0
    %9 = vsyncpa [#allocation7], 0
    %s10 = scalar_lea.sflag [#allocation7], 1
    %11 = vsyncpa %s10, 0
    %12 = vsyncpa [#allocation5], 0
    %s13 = scalar_lea.sflag [#allocation5], 1
    %14 = vsyncpa %s13, 0
    loop: start=0, step=1, limit=4
    $region2: #{tpu_custom_call.1} parent=1 // loop_pre_header
      _
    $region3: #{tpu_custom_call.1} parent=1 // loop_header
      %s16 = sphi 0, %s20
      %p17 = scmp.ge.s32.totalorder %s16, 4
      %s23 = sphi 0, %s35
      %s24 = sphi 0, %s31
      %s25 = sphi 0, %s23
      %s26 = sphi 0, %s24
      %s27 = sphi 0, %s25
      %s28 = sphi 0, %s26
      %s38 = sphi 0, %s40
      %s41 = sphi 0, %s38
      %s42 = sphi 0, %s41
      %s58 = sphi 0, %s42
      %s66 = sphi 0, %s68
      %s69 = sphi 0, %s66
      %s70 = sphi 0, %s69
      %s86 = sphi 0, %s70
      %s92 = sphi 0, %s94
      %s95 = sphi 0, %s92
      %s96 = sphi 0, %s95
      %s112 = sphi 0, %s96
      %s118 = sphi 0, %s120
      %s121 = sphi 0, %s118
      %s122 = sphi 0, %s121
      %s138 = sphi 0, %s122
    $region4: #{tpu_custom_call.1} parent=1 // loop_header_branch
      %19 = sbr.rel (%p17) target = $region8
    $region5: #{tpu_custom_call.1} parent=1 // loop_body
      %s21 = ssub.s32 %s16, 1
      %s22 = ssub.s32 %s16, 2
      %s29 = sadd.s32 1, %s24
      %p30 = scmp.ge.s32.totalorder %s29, 1
      %s31 = scalar_select %p30, 0, %s29
      %s32 = sadd.s32 1, %s23
      %s33 = scalar_select %p30, %s32, %s23
      %p34 = scmp.ge.s32.totalorder %s33, 2
      %s35 = scalar_select %p34, 0, %s33
      %s36 = ssub.s32 %s24, %s31
      %p37 = scmp.eq.s32.totalorder %s36, 0
      %s39 = sadd.s32 %s38, 1
      %s40 = scalar_select %p37, %s38, %s39
      %p43 = pneg %p37
      %p44 = scmp.eq.s32.totalorder %s16, 1
      %p45 = por %p43, %p44
      %p46 = scmp.ne.s32.totalorder %s38, %s41
      %p47 = scmp.eq.s32.totalorder %s16, 0
      %p48 = por %p46, %p47
      %p49 = scmp.ne.s32.totalorder %s38, %s41
      %p50 = scmp.eq.s32.totalorder %s21, 1
      %p51 = por %p49, %p50
      %p52 = scmp.ne.s32.totalorder %s41, %s42
      %p53 = scmp.eq.s32.totalorder %s21, 0
      %p54 = por %p52, %p53
      %p55 = scmp.ne.s32.totalorder %s41, %s42
      %p56 = scmp.eq.s32.totalorder %s22, 1
      %p57 = por %p55, %p56
      %p59 = scmp.ne.s32.totalorder %s42, %s58
      %p60 = scmp.eq.s32.totalorder %s22, 0
      %p61 = por %p59, %p60
      %s62 = ssub.s32 %s24, %s31
      %s63 = ssub.s32 %s23, %s35
      %s64 = sor.u32 %s62, %s63
      %p65 = scmp.eq.s32.totalorder %s64, 0
      %s67 = sadd.s32 %s66, 1
      %s68 = scalar_select %p65, %s66, %s67
      %p71 = pneg %p65
      %p72 = scmp.eq.s32.totalorder %s16, 1
      %p73 = por %p71, %p72
      %p74 = scmp.ne.s32.totalorder %s66, %s69
      %p75 = scmp.eq.s32.totalorder %s16, 0
      %p76 = por %p74, %p75
      %p77 = scmp.ne.s32.totalorder %s66, %s69
      %p78 = scmp.eq.s32.totalorder %s21, 1
      %p79 = por %p77, %p78
      %p80 = scmp.ne.s32.totalorder %s69, %s70
      %p81 = scmp.eq.s32.totalorder %s21, 0
      %p82 = por %p80, %p81
      %p83 = scmp.ne.s32.totalorder %s69, %s70
      %p84 = scmp.eq.s32.totalorder %s22, 1
      %p85 = por %p83, %p84
      %p87 = scmp.ne.s32.totalorder %s70, %s86
      %p88 = scmp.eq.s32.totalorder %s22, 0
      %p89 = por %p87, %p88
      %s90 = ssub.s32 %s23, %s35
      %p91 = scmp.eq.s32.totalorder %s90, 0
      %s93 = sadd.s32 %s92, 1
      %s94 = scalar_select %p91, %s92, %s93
      %p97 = pneg %p91
      %p98 = scmp.eq.s32.totalorder %s16, 1
      %p99 = por %p97, %p98
      %p100 = scmp.ne.s32.totalorder %s92, %s95
      %p101 = scmp.eq.s32.totalorder %s16, 0
      %p102 = por %p100, %p101
      %p103 = scmp.ne.s32.totalorder %s92, %s95
      %p104 = scmp.eq.s32.totalorder %s21, 1
      %p105 = por %p103, %p104
      %p106 = scmp.ne.s32.totalorder %s95, %s96
      %p107 = scmp.eq.s32.totalorder %s21, 0
      %p108 = por %p106, %p107
      %p109 = scmp.ne.s32.totalorder %s95, %s96
      %p110 = scmp.eq.s32.totalorder %s22, 1
      %p111 = por %p109, %p110
      %p113 = scmp.ne.s32.totalorder %s96, %s112
      %p114 = scmp.eq.s32.totalorder %s22, 0
      %p115 = por %p113, %p114
      %s116 = ssub.s32 %s23, %s35
      %p117 = scmp.eq.s32.totalorder %s116, 0
      %s119 = sadd.s32 %s118, 1
      %s120 = scalar_select %p117, %s118, %s119
      %p123 = pneg %p117
      %p124 = scmp.eq.s32.totalorder %s16, 1
      %p125 = por %p123, %p124
      %p126 = scmp.ne.s32.totalorder %s118, %s121
      %p127 = scmp.eq.s32.totalorder %s16, 0
      %p128 = por %p126, %p127
      %p129 = scmp.ne.s32.totalorder %s118, %s121
      %p130 = scmp.eq.s32.totalorder %s21, 1
      %p131 = por %p129, %p130
      %p132 = scmp.ne.s32.totalorder %s121, %s122
      %p133 = scmp.eq.s32.totalorder %s21, 0
      %p134 = por %p132, %p133
      %p135 = scmp.ne.s32.totalorder %s121, %s122
      %p136 = scmp.eq.s32.totalorder %s22, 1
      %p137 = por %p135, %p136
      %p139 = scmp.ne.s32.totalorder %s122, %s138
      %p140 = scmp.eq.s32.totalorder %s22, 0
      %p141 = por %p139, %p140
      %p142 = scmp.le.s32.totalorder 1, %s16
      %p143 = scmp.lt.s32.totalorder %s16, 3
      %p144 = pnand %p142, %p143
      %p145 = pneg %p144
      // Predicated region
      $region9: #{tpu_custom_call.1} parent=5 // pred_check
        _
      $region10: #{tpu_custom_call.1} parent=5 // pred_check_branch
        %147 = sbr.rel (%p144) target = $region12
      $region11: #{tpu_custom_call.1} parent=5 // pred_region
        %s148 = ssub.s32 %s16, 1
        // Predicated region
        $region13: #{tpu_custom_call.1} parent=11 // pred_check
          %p149 = pneg %p54
        $region14: #{tpu_custom_call.1} parent=11 // pred_check_branch
          %151 = sbr.rel (%p149) target = $region16
        $region15: #{tpu_custom_call.1} parent=11 // pred_region
          %s152 = smul.u32 4, %s26
          %s154 = ssub.s32 64, 64
          %155 = vsyncadd [#allocation4], %s154
          %s156 = smul.addr %s152, 16
          %s157 = scalar_lea.hbm %s0, %s156
          %s159 = sshll.u32 [#allocation3], 4
          %s160 = int_to_ptr.vmem [resolvable:$true] %s159
          %162 = dma.hbm_to_vmem [thread:$0]  %s157, 64, %s160, [#allocation4]
        $region16: #{tpu_custom_call.1} parent=11 // pred_fallthru
          _
      $region12: #{tpu_custom_call.1} parent=5 // pred_fallthru
        _
      %p163 = scmp.lt.s32.totalorder %s16, 2
      // Predicated region
      $region17: #{tpu_custom_call.1} parent=5 // pred_check
        %p164 = pneg %p163
      $region18: #{tpu_custom_call.1} parent=5 // pred_check_branch
        %166 = sbr.rel (%p164) target = $region20
      $region19: #{tpu_custom_call.1} parent=5 // pred_region
        // Predicated region
        $region21: #{tpu_custom_call.1} parent=19 // pred_check
          %p167 = pneg %p76
        $region22: #{tpu_custom_call.1} parent=19 // pred_check_branch
          %169 = sbr.rel (%p167) target = $region24
        $region23: #{tpu_custom_call.1} parent=19 // pred_region
          %s170 = sand.u32 %s66, 1
          %s171 = scalar_lea.sflag [#allocation7], %s170
          %s172 = sand.u32 %s66, 1
          %s173 = smul.addr %s172, 512
          %s174 = scalar_lea.vmem [#allocation6], %s173
          %s175 = smul.u32 64, %s24
          %s177 = ssub.s32 8192, 8192
          %178 = vsyncadd %s171, %s177
          %s179 = smul.addr %s175, 2
          %s180 = sadd.s32 %s23, %s179
          %s181 = smul.addr %s180, 128
          %s182 = scalar_lea.hbm %s1, %s181
          %s183 = sshll.u32 %s174, 4
          %s184 = int_to_ptr.vmem [resolvable:$true] %s183
          %189 = dma.hbm_to_vmem [thread:$0]  %s182, 8192, %s184, %s171, 256, 128, 8
        $region24: #{tpu_custom_call.1} parent=19 // pred_fallthru
          _
        // Predicated region
        $region25: #{tpu_custom_call.1} parent=19 // pred_check
          %p190 = pneg %p102
        $region26: #{tpu_custom_call.1} parent=19 // pred_check_branch
          %192 = sbr.rel (%p190) target = $region28
        $region27: #{tpu_custom_call.1} parent=19 // pred_region
          %p193 = scmp.lt.s32.totalorder %s23, 1
          %s194 = scalar_select %p193, %s23, 1
          %s195 = scalar_lea.vmem %s2, %s194
        $region28: #{tpu_custom_call.1} parent=19 // pred_fallthru
          _
      $region20: #{tpu_custom_call.1} parent=5 // pred_fallthru
        _
      %p196 = scmp.le.s32.totalorder 1, %s16
      %p197 = scmp.lt.s32.totalorder %s16, 3
      %p198 = pnand %p196, %p197
      %p199 = pneg %p198
      // Predicated region
      $region29: #{tpu_custom_call.1} parent=5 // pred_check
        _
      $region30: #{tpu_custom_call.1} parent=5 // pred_check_branch
        %201 = sbr.rel (%p198) target = $region32
      $region31: #{tpu_custom_call.1} parent=5 // pred_region
        %s202 = ssub.s32 %s16, 1
        // Predicated region
        $region33: #{tpu_custom_call.1} parent=31 // pred_check
          %p203 = pneg %p54
        $region34: #{tpu_custom_call.1} parent=31 // pred_check_branch
          %205 = sbr.rel (%p203) target = $region36
        $region35: #{tpu_custom_call.1} parent=31 // pred_region
          %206 = dma.done [#allocation4], 64
        $region36: #{tpu_custom_call.1} parent=31 // pred_fallthru
          _
        %s207 = sand.u32 %s69, 1
        %s208 = scalar_lea.sflag [#allocation7], %s207
        %s209 = sand.u32 %s69, 1
        %s210 = smul.addr %s209, 512
        %s211 = scalar_lea.vmem [#allocation6], %s210
        // Predicated region
        $region37: #{tpu_custom_call.1} parent=31 // pred_check
          %p212 = pneg %p82
        $region38: #{tpu_custom_call.1} parent=31 // pred_check_branch
          %214 = sbr.rel (%p212) target = $region40
        $region39: #{tpu_custom_call.1} parent=31 // pred_region
          %215 = dma.done %s208, 8192
        $region40: #{tpu_custom_call.1} parent=31 // pred_fallthru
          _
        %p216 = pneg %p54
        %p217 = pneg %p51
        %s218 = sand.u32 %s69, 1
        %s219 = scalar_lea.sflag [#allocation7], %s218
        %s220 = sand.u32 %s69, 1
        %s221 = smul.addr %s220, 512
        %s222 = scalar_lea.vmem [#allocation6], %s221
        %p223 = pneg %p82
        %p224 = pneg %p79
        %p225 = scmp.lt.s32.totalorder %s25, 1
        %s226 = scalar_select %p225, %s25, 1
        %s227 = scalar_lea.vmem %s2, %s226
        %p228 = pneg %p108
        %p229 = pneg %p105
        %p230 = pneg %p134
        %p231 = pneg %p131
        %s232 = sand.u32 %s121, 1
        %s233 = scalar_lea.sflag [#allocation5], %s232
        %s234 = sand.u32 %s121, 1
        %s235 = scalar_lea.vmem [#allocation8], %s234
        %s236 = smul.u32 4, %s26
        %s237 = smul.u32 64, %s26
        %p238 = scmp.lt.s32.totalorder %s25, 1
        %s239 = scalar_select %p238, %s25, 1
        %s240 = scalar_lea.vmem %s2, %s239
        %p241 = scmp.eq.s32.totalorder %s26, 0
        // Predicated region
        $region41: #{tpu_custom_call.1} parent=31 // pred_check
          %p242 = pneg %p241
        $region42: #{tpu_custom_call.1} parent=31 // pred_check_branch
          %244 = sbr.rel (%p242) target = $region44
        $region43: #{tpu_custom_call.1} parent=31 // pred_region
          %245 = vst [vmem:[#allocation2] sm:$0xff] 0.0
        $region44: #{tpu_custom_call.1} parent=31 // pred_fallthru
          _
        %v246 = vld [vmem:[#allocation3] sm:$0xf]
        %v248 = vlaneseq
        %v249 = vshrl.u32 %v248, 7
        %v250 = vsub.s32 0, %v249
        %v251 = vrot.slane %v246, %v250
        %v252 = vlaneseq
        %v253 = vshrl.u32 %v252, 7
        %v254 = vsub.s32 1, %v253
        %v255 = vrot.slane %v246, %v254
        %v256 = vlaneseq
        %v257 = vshrl.u32 %v256, 7
        %v258 = vsub.s32 2, %v257
        %v259 = vrot.slane %v246, %v258
        %v260 = vlaneseq
        %v261 = vshrl.u32 %v260, 7
        %v262 = vsub.s32 3, %v261
        %v263 = vrot.slane %v246, %v262
        %v268 = vld [vmem:[#allocation2] sm:$0xff]
        %v269 = vld [vmem:[%s211] sm:$0xff]
        %v270 = vld [vmem:[%s211 + $0x8] sm:$0xff]
        %v271 = vld [vmem:[%s211 + $0x10] sm:$0xff]
        %v272 = vld [vmem:[%s211 + $0x18] sm:$0xff]
        %v273 = vld [vmem:[%s211 + $0x20] sm:$0xff]
        %v274 = vld [vmem:[%s211 + $0x28] sm:$0xff]
        %v275 = vld [vmem:[%s211 + $0x30] sm:$0xff]
        %v276 = vld [vmem:[%s211 + $0x38] sm:$0xff]
        %v277 = vld [vmem:[%s211 + $0x40] sm:$0xff]
        %v278 = vld [vmem:[%s211 + $0x48] sm:$0xff]
        %v279 = vld [vmem:[%s211 + $0x50] sm:$0xff]
        %v280 = vld [vmem:[%s211 + $0x58] sm:$0xff]
        %v281 = vld [vmem:[%s211 + $0x60] sm:$0xff]
        %v282 = vld [vmem:[%s211 + $0x68] sm:$0xff]
        %v283 = vld [vmem:[%s211 + $0x70] sm:$0xff]
        %v284 = vld [vmem:[%s211 + $0x78] sm:$0xff]
        %v285 = vld [vmem:[%s211 + $0x80] sm:$0xff]
        %v286 = vld [vmem:[%s211 + $0x88] sm:$0xff]
        %v287 = vld [vmem:[%s211 + $0x90] sm:$0xff]
        %v288 = vld [vmem:[%s211 + $0x98] sm:$0xff]
        %v289 = vld [vmem:[%s211 + $0xa0] sm:$0xff]
        %v290 = vld [vmem:[%s211 + $0xa8] sm:$0xff]
        %v291 = vld [vmem:[%s211 + $0xb0] sm:$0xff]
        %v292 = vld [vmem:[%s211 + $0xb8] sm:$0xff]
        %v293 = vld [vmem:[%s211 + $0xc0] sm:$0xff]
        %v294 = vld [vmem:[%s211 + $0xc8] sm:$0xff]
        %v295 = vld [vmem:[%s211 + $0xd0] sm:$0xff]
        %v296 = vld [vmem:[%s211 + $0xd8] sm:$0xff]
        %v297 = vld [vmem:[%s211 + $0xe0] sm:$0xff]
        %v298 = vld [vmem:[%s211 + $0xe8] sm:$0xff]
        %v299 = vld [vmem:[%s211 + $0xf0] sm:$0xff]
        %v300 = vld [vmem:[%s211 + $0xf8] sm:$0xff]
        %v301 = vld [vmem:[%s211 + $0x100] sm:$0xff]
        %v302 = vld [vmem:[%s211 + $0x108] sm:$0xff]
        %v303 = vld [vmem:[%s211 + $0x110] sm:$0xff]
        %v304 = vld [vmem:[%s211 + $0x118] sm:$0xff]
        %v305 = vld [vmem:[%s211 + $0x120] sm:$0xff]
        %v306 = vld [vmem:[%s211 + $0x128] sm:$0xff]
        %v307 = vld [vmem:[%s211 + $0x130] sm:$0xff]
        %v308 = vld [vmem:[%s211 + $0x138] sm:$0xff]
        %v309 = vld [vmem:[%s211 + $0x140] sm:$0xff]
        %v310 = vld [vmem:[%s211 + $0x148] sm:$0xff]
        %v311 = vld [vmem:[%s211 + $0x150] sm:$0xff]
        %v312 = vld [vmem:[%s211 + $0x158] sm:$0xff]
        %v313 = vld [vmem:[%s211 + $0x160] sm:$0xff]
        %v314 = vld [vmem:[%s211 + $0x168] sm:$0xff]
        %v315 = vld [vmem:[%s211 + $0x170] sm:$0xff]
        %v316 = vld [vmem:[%s211 + $0x178] sm:$0xff]
        %v317 = vld [vmem:[%s211 + $0x180] sm:$0xff]
        %v318 = vld [vmem:[%s211 + $0x188] sm:$0xff]
        %v319 = vld [vmem:[%s211 + $0x190] sm:$0xff]
        %v320 = vld [vmem:[%s211 + $0x198] sm:$0xff]
        %v321 = vld [vmem:[%s211 + $0x1a0] sm:$0xff]
        %v322 = vld [vmem:[%s211 + $0x1a8] sm:$0xff]
        %v323 = vld [vmem:[%s211 + $0x1b0] sm:$0xff]
        %v324 = vld [vmem:[%s211 + $0x1b8] sm:$0xff]
        %v325 = vld [vmem:[%s211 + $0x1c0] sm:$0xff]
        %v326 = vld [vmem:[%s211 + $0x1c8] sm:$0xff]
        %v327 = vld [vmem:[%s211 + $0x1d0] sm:$0xff]
        %v328 = vld [vmem:[%s211 + $0x1d8] sm:$0xff]
        %v329 = vld [vmem:[%s211 + $0x1e0] sm:$0xff]
        %v330 = vld [vmem:[%s211 + $0x1e8] sm:$0xff]
        %v331 = vld [vmem:[%s211 + $0x1f0] sm:$0xff]
        %v332 = vld [vmem:[%s211 + $0x1f8] sm:$0xff]
        %333 = vmatprep.subr.mxu0 0.0
        %334 = vmatpush1.msra.mxu0 %v269
        %335 = vmatprep.subr.mxu0 0.0
        %336 = vmatpush1.msra.mxu0 %v270
        %337 = vmatprep.subr.mxu0 0.0
        %338 = vmatpush1.msra.mxu0 %v271
        %339 = vmatprep.subr.mxu0 0.0
        %340 = vmatpush1.msra.mxu0 %v272
        %341 = vmatprep.subr.mxu0 0.0
        %342 = vmatpush1.msra.mxu0 %v273
        %343 = vmatprep.subr.mxu0 0.0
        %344 = vmatpush1.msra.mxu0 %v274
        %345 = vmatprep.subr.mxu0 0.0
        %346 = vmatpush1.msra.mxu0 %v275
        %347 = vmatprep.subr.mxu0 0.0
        %348 = vmatpush1.msra.mxu0 %v276
        %349 = vmatprep.subr.mxu0 0.0
        %350 = vmatpush1.msra.mxu0 %v277
        %351 = vmatprep.subr.mxu0 0.0
        %352 = vmatpush1.msra.mxu0 %v278
        %353 = vmatprep.subr.mxu0 0.0
        %354 = vmatpush1.msra.mxu0 %v279
        %355 = vmatprep.subr.mxu0 0.0
        %356 = vmatpush1.msra.mxu0 %v280
        %357 = vmatprep.subr.mxu0 0.0
        %358 = vmatpush1.msra.mxu0 %v281
        %359 = vmatprep.subr.mxu0 0.0
        %360 = vmatpush1.msra.mxu0 %v282
        %361 = vmatprep.subr.mxu0 0.0
        %362 = vmatpush1.msra.mxu0 %v283
        %363 = vmatprep.subr.mxu0 0.0
        %364 = vmatpush1.msra.mxu0 %v284
        %365 = vmatprep.subr.mxu0 0.0
        %366 = vmatpush1.msra.mxu0 %v285
        %367 = vmatprep.subr.mxu0 0.0
        %368 = vmatpush1.msra.mxu0 %v286
        %369 = vmatprep.subr.mxu0 0.0
        %370 = vmatpush1.msra.mxu0 %v287
        %371 = vmatprep.subr.mxu0 0.0
        %372 = vmatpush1.msra.mxu0 %v288
        %373 = vmatprep.subr.mxu0 0.0
        %374 = vmatpush1.msra.mxu0 %v289
        %375 = vmatprep.subr.mxu0 0.0
        %376 = vmatpush1.msra.mxu0 %v290
        %377 = vmatprep.subr.mxu0 0.0
        %378 = vmatpush1.msra.mxu0 %v291
        %379 = vmatprep.subr.mxu0 0.0
        %380 = vmatpush1.msra.mxu0 %v292
        %381 = vmatprep.subr.mxu0 0.0
        %382 = vmatpush1.msra.mxu0 %v293
        %383 = vmatprep.subr.mxu0 0.0
        %384 = vmatpush1.msra.mxu0 %v294
        %385 = vmatprep.subr.mxu0 0.0
        %386 = vmatpush1.msra.mxu0 %v295
        %387 = vmatprep.subr.mxu0 0.0
        %388 = vmatpush1.msra.mxu0 %v296
        %389 = vmatprep.subr.mxu0 0.0
        %390 = vmatpush1.msra.mxu0 %v297
        %391 = vmatprep.subr.mxu0 0.0
        %392 = vmatpush1.msra.mxu0 %v298
        %393 = vmatprep.subr.mxu0 0.0
        %394 = vmatpush1.msra.mxu0 %v299
        %395 = vmatprep.subr.mxu0 0.0
        %396 = vmatpush1.msra.mxu0 %v300
        %397 = vmatprep.mubr.f32.mxu0 %v255
        %398 = vmatmul.mubr.f32.gmra.mrb[0].mxu0 %v251
        %v399 = vpop.f32.mrb[0].mxu0
        %v400 = vadd.f32 0.0, %v399
        %v401 = vpop.f32.mrb[0].mxu0
        %402 = vdwg.mxu0
        %403 = vmatprep.subr.mxu0 0.0
        %404 = vmatpush1.msra.mxu0 %v301
        %405 = vmatprep.subr.mxu0 0.0
        %406 = vmatpush1.msra.mxu0 %v302
        %407 = vmatprep.subr.mxu0 0.0
        %408 = vmatpush1.msra.mxu0 %v303
        %409 = vmatprep.subr.mxu0 0.0
        %410 = vmatpush1.msra.mxu0 %v304
        %411 = vmatprep.subr.mxu0 0.0
        %412 = vmatpush1.msra.mxu0 %v305
        %413 = vmatprep.subr.mxu0 0.0
        %414 = vmatpush1.msra.mxu0 %v306
        %415 = vmatprep.subr.mxu0 0.0
        %416 = vmatpush1.msra.mxu0 %v307
        %417 = vmatprep.subr.mxu0 0.0
        %418 = vmatpush1.msra.mxu0 %v308
        %419 = vmatprep.subr.mxu0 0.0
        %420 = vmatpush1.msra.mxu0 %v309
        %421 = vmatprep.subr.mxu0 0.0
        %422 = vmatpush1.msra.mxu0 %v310
        %423 = vmatprep.subr.mxu0 0.0
        %424 = vmatpush1.msra.mxu0 %v311
        %425 = vmatprep.subr.mxu0 0.0
        %426 = vmatpush1.msra.mxu0 %v312
        %427 = vmatprep.subr.mxu0 0.0
        %428 = vmatpush1.msra.mxu0 %v313
        %429 = vmatprep.subr.mxu0 0.0
        %430 = vmatpush1.msra.mxu0 %v314
        %431 = vmatprep.subr.mxu0 0.0
        %432 = vmatpush1.msra.mxu0 %v315
        %433 = vmatprep.subr.mxu0 0.0
        %434 = vmatpush1.msra.mxu0 %v316
        %435 = vmatprep.subr.mxu0 0.0
        %436 = vmatpush1.msra.mxu0 %v317
        %437 = vmatprep.subr.mxu0 0.0
        %438 = vmatpush1.msra.mxu0 %v318
        %439 = vmatprep.subr.mxu0 0.0
        %440 = vmatpush1.msra.mxu0 %v319
        %441 = vmatprep.subr.mxu0 0.0
        %442 = vmatpush1.msra.mxu0 %v320
        %443 = vmatprep.subr.mxu0 0.0
        %444 = vmatpush1.msra.mxu0 %v321
        %445 = vmatprep.subr.mxu0 0.0
        %446 = vmatpush1.msra.mxu0 %v322
        %447 = vmatprep.subr.mxu0 0.0
        %448 = vmatpush1.msra.mxu0 %v323
        %449 = vmatprep.subr.mxu0 0.0
        %450 = vmatpush1.msra.mxu0 %v324
        %451 = vmatprep.subr.mxu0 0.0
        %452 = vmatpush1.msra.mxu0 %v325
        %453 = vmatprep.subr.mxu0 0.0
        %454 = vmatpush1.msra.mxu0 %v326
        %455 = vmatprep.subr.mxu0 0.0
        %456 = vmatpush1.msra.mxu0 %v327
        %457 = vmatprep.subr.mxu0 0.0
        %458 = vmatpush1.msra.mxu0 %v328
        %459 = vmatprep.subr.mxu0 0.0
        %460 = vmatpush1.msra.mxu0 %v329
        %461 = vmatprep.subr.mxu0 0.0
        %462 = vmatpush1.msra.mxu0 %v330
        %463 = vmatprep.subr.mxu0 0.0
        %464 = vmatpush1.msra.mxu0 %v331
        %465 = vmatprep.subr.mxu0 0.0
        %466 = vmatpush1.msra.mxu0 %v332
        %467 = vmatprep.mubr.f32.mxu0 %v263
        %468 = vmatmul.mubr.f32.gmra.mrb[0].mxu0 %v259
        %v469 = vpop.f32.mrb[0].mxu0
        %v470 = vadd.f32 %v400, %v469
        %v471 = vpop.f32.mrb[0].mxu0
        %472 = vdwg.mxu0
        %v473 = vadd.f32 %v268, %v470
        %474 = vst [vmem:[#allocation2] sm:$0xff] %v473
        // Predicated region
        $region45: #{tpu_custom_call.1} parent=31 // pred_check
          %p475 = pneg %p241
        $region46: #{tpu_custom_call.1} parent=31 // pred_check_branch
          %477 = sbr.rel (%p475) target = $region48
        $region47: #{tpu_custom_call.1} parent=31 // pred_region
          %v478 = vld [vmem:[#allocation2] sm:$0x1]
          %v479 = vld [vmem:[%s240] sm:$0x1]
          %v480 = vadd.f32 %v478, %v479
          %vm481 = vcmp.ge.f32.partialorder %v480, 0.0
          %v482 = vmul.f32 %v480, 0.1
          %v483 = vsel %vm481, %v480, %v482
          %484 = vst [vmem:[%s235] sm:$0x1] %v483
        $region48: #{tpu_custom_call.1} parent=31 // pred_fallthru
          _
        %s485 = sand.u32 %s121, 1
        %s486 = scalar_lea.sflag [#allocation5], %s485
        %s487 = sand.u32 %s121, 1
        %s488 = scalar_lea.vmem [#allocation8], %s487
        // Predicated region
        $region49: #{tpu_custom_call.1} parent=31 // pred_check
          %p489 = pneg %p131
        $region50: #{tpu_custom_call.1} parent=31 // pred_check_branch
          %491 = sbr.rel (%p489) target = $region52
        $region51: #{tpu_custom_call.1} parent=31 // pred_region
          %s493 = ssub.s32 16, 16
          %494 = vsyncadd %s486, %s493
          %s495 = smul.addr %s25, 16
          %s496 = scalar_lea.hbm %s3, %s495
          %s498 = sshll.u32 %s488, 4
          %s499 = int_to_ptr.vmem [resolvable:$true] %s498
          %501 = dma.vmem_to_hbm [thread:$0]  %s499, 16, %s496, %s486
        $region52: #{tpu_custom_call.1} parent=31 // pred_fallthru
          _
      $region32: #{tpu_custom_call.1} parent=5 // pred_fallthru
        _
      %p502 = scmp.le.s32.totalorder 2, %s16
      // Predicated region
      $region53: #{tpu_custom_call.1} parent=5 // pred_check
        %p503 = pneg %p502
      $region54: #{tpu_custom_call.1} parent=5 // pred_check_branch
        %505 = sbr.rel (%p503) target = $region56
      $region55: #{tpu_custom_call.1} parent=5 // pred_region
        %s506 = ssub.s32 %s16, 2
        // Predicated region
        $region57: #{tpu_custom_call.1} parent=55 // pred_check
          %p507 = pneg %p137
        $region58: #{tpu_custom_call.1} parent=55 // pred_check_branch
          %509 = sbr.rel (%p507) target = $region60
        $region59: #{tpu_custom_call.1} parent=55 // pred_region
          %s510 = sand.u32 %s122, 1
          %s511 = scalar_lea.sflag [#allocation5], %s510
          %s512 = sand.u32 %s122, 1
          %s513 = scalar_lea.vmem [#allocation8], %s512
          %514 = dma.done %s511, 16
        $region60: #{tpu_custom_call.1} parent=55 // pred_fallthru
          _
      $region56: #{tpu_custom_call.1} parent=5 // pred_fallthru
        _
    $region6: #{tpu_custom_call.1} parent=1 // loop_footer
      %s20 = sadd.s32 1, %s16
    $region7: #{tpu_custom_call.1} parent=1 // loop_footer_branch
      %15 = sbr.rel target = $region3
    $region8: #{tpu_custom_call.1} parent=1 // loop_exit
      _
    %515 = vsyncpa [#allocation4], 1
    %s516 = scalar_lea.sflag [#allocation4], 1
    %517 = vsyncpa %s516, 1
    %518 = vsyncpa [#allocation7], 1
    %s519 = scalar_lea.sflag [#allocation7], 1
    %520 = vsyncpa %s519, 1
    %521 = vsyncpa [#allocation5], 1
    %s522 = scalar_lea.sflag [#allocation5], 1
    %523 = vsyncpa %s522, 1

</llo_original>
